<compile_context>
chip_gen: v7x
topology: tpu7x:2x2x1
jax: 0.10.0
libtpu: 0.0.40
codegen_flags: <defaults>
</compile_context>

<pallas_src>
import functools

import jax
import jax.numpy as jnp
from jax import lax
from jax.experimental import pallas as pl
from jax.experimental.pallas import tpu as pltpu


# ---------------------------------------------------------------------------
# portable in-kernel random bits (no pltpu.prng_*, so interpret mode also works)
# ---------------------------------------------------------------------------
def _c32(v):
    """Python int -> int32 constant with two's-complement wrap."""
    v &= 0xFFFFFFFF
    if v >= 1 << 31:
        v -= 1 << 32
    return jnp.int32(v)


def _rotl32(x, r):
    r = int(r) % 32
    return lax.shift_left(x, jnp.int32(r)) | lax.shift_right_logical(
        x, jnp.int32(32 - r)
    )


# threefry-2x32 rotation schedule (reduced rounds -- plenty for dropout masks)
_ROUND_ROT = (13, 15, 26, 6, 17, 29)


def _hash_bits_i32(idx, seed):
    """Counter-based ARX mixer: int32 counter + int32 seed -> int32 bits.

    Only add / xor / rotate (no integer multiplies), so it lowers through Mosaic
    and through the Pallas CPU interpreter alike.
    """
    ks0 = seed
    ks1 = seed ^ _c32(0x1BD11BDA)
    x0 = idx + ks0
    x1 = jnp.zeros_like(idx) + ks1
    for i, r in enumerate(_ROUND_ROT):
        x0 = x0 + x1
        x1 = _rotl32(x1, r)
        x1 = x1 ^ x0
        if i == 2:  # mid-schedule key injection
            x0 = x0 + ks1
            x1 = x1 + ks0 + _c32(1)
    x0 = x0 + ks0
    x1 = x1 + ks1 + _c32(2)
    return x0 ^ x1


# ---------------------------------------------------------------------------
# kernel
# ---------------------------------------------------------------------------
def _abs_pos_emb_kernel(seed_ref, x_ref, emb_ref, o_ref, *, dropout_p, apply_dropout):
    """One grid step: block of x (b_tile, row_tile, C) + emb block (1, row_tile, C).

    seed_ref : SMEM scalar-prefetch ref, shape (1,), int32
    """
    # Native-dtype add (no f32 upcast): bf16 adds run on the bf16 VALU on v6e/v7x.
    y = x_ref[...] + emb_ref[...]

    if apply_dropout:
        nb, tr, nc = x_ref.shape
        shape = (nb, tr, nc)
        # Globally unique flat element index -> independent bits per element,
        # independent of the tiling choice within a call.
        if nb == 1:
            b_idx = pl.program_id(1)
        else:
            b_idx = (
                lax.broadcasted_iota(jnp.int32, shape, 0) + pl.program_id(1) * nb
            )
        row = lax.broadcasted_iota(jnp.int32, shape, 1) + pl.program_id(0) * tr
        col = lax.broadcasted_iota(jnp.int32, shape, 2)
        n_batch = pl.num_programs(1) * nb
        flat = (row * n_batch + b_idx) * nc + col

        bits = _hash_bits_i32(flat, seed_ref[0])
        r = bits & jnp.int32(0x7FFFFFFF)  # uniform over [0, 2^31)
        thresh = jnp.int32(min(int(round(dropout_p * (1 << 31))), (1 << 31) - 1))
        keep = r >= thresh  # P(keep) = 1 - p ; pure integer compare
        scale = jnp.asarray(1.0 / (1.0 - dropout_p), dtype=y.dtype)
        y = jnp.where(keep, y, jnp.zeros_like(y)) * scale

    o_ref[...] = y.astype(o_ref.dtype)


# ---------------------------------------------------------------------------
# tiling helpers
# ---------------------------------------------------------------------------
_TARGET_BLOCK_BYTES = 1 << 20  # ~1 MiB blocks: ~85% of HBM roofline, safe on v7x VMEM


def _pick_row_tile(R, C, itemsize, target_bytes=_TARGET_BLOCK_BYTES):
    """Largest multiple-of-8 divisor of R whose (row_tile, C) block fits the target."""
    if R % 8 != 0:
        return R  # block must equal the full dim in this case
    best = 8
    for t in range(8, R + 1, 8):
        if R % t == 0 and t * C * itemsize <= target_bytes:
            best = t
    return best


def _pick_batch_tile(B, R, C, itemsize, row_tile, target_bytes=_TARGET_BLOCK_BYTES):
    """If the whole (R, C) plane is tiny, fold several batch elements per block."""
    if row_tile != R:
        return 1
    bt = 1
    for cand in range(1, B + 1):
        if B % cand == 0 and cand * R * C * itemsize <= target_bytes:
            bt = cand
    return bt


# ---------------------------------------------------------------------------
# pallas_call wrapper
# ---------------------------------------------------------------------------
def _abs_pos_emb_call(x3, emb3, *, b_tile, row_tile, dropout_p, training, seed):
    B, R, C = x3.shape
    # Batch is the innermost grid axis -> the embedding tile (indexed by the row
    # tile only) stays resident in VMEM across the batch loop.
    grid = (R // row_tile, B // b_tile)
    apply_dropout = bool(training) and float(dropout_p) > 0.0

    kernel = functools.partial(
        _abs_pos_emb_kernel,
        dropout_p=float(dropout_p),
        apply_dropout=apply_dropout,
    )
    seed_arr = jnp.asarray(seed, dtype=jnp.int32).reshape((1,))
    itemsize = x3.dtype.itemsize

    return pl.pallas_call(
        kernel,
        out_shape=jax.ShapeDtypeStruct((B, R, C), x3.dtype),
        grid_spec=pltpu.PrefetchScalarGridSpec(
            num_scalar_prefetch=1,
            grid=grid,
            in_specs=[
                pl.BlockSpec((b_tile, row_tile, C), lambda s, b, sref: (b, s, 0)),
                pl.BlockSpec((1, row_tile, C), lambda s, b, sref: (0, s, 0)),
            ],
            out_specs=pl.BlockSpec((b_tile, row_tile, C), lambda s, b, sref: (b, s, 0)),
        ),
        compiler_params=pltpu.CompilerParams(
            # Counter-based per-element bits -> no cross-step dependency, so both
            # axes can be sharded across TensorCores (2x on v7x, no-op on v5e/v6e).
            dimension_semantics=("parallel", "parallel"),
        ),
        cost_estimate=pl.CostEstimate(
            flops=B * R * C,
            transcendentals=0,
            bytes_accessed=2 * B * R * C * itemsize + R * C * emb3.dtype.itemsize,
        ),
    )(seed_arr, x3, emb3)


def absolute_position_embedding(x, embedding, *, dropout_p=0.1, training=False, seed=0):
    """Forward of AbsolutePositionEmbedding: dropout(x + embedding[:, :S, :]).

    x         : (B, S, D)
    embedding : (1, max_seq_len, D) with max_seq_len >= S
    """
    B, S, D = x.shape
    L = embedding.shape[1]
    assert embedding.shape[0] == 1 and embedding.shape[2] == D and L >= S
    itemsize = x.dtype.itemsize

    if D % 128 == 0 and S % 8 == 0:
        # Lane-dense path (typical transformer dims).  Tile the sequence axis and
        # pass the FULL embedding table: the BlockSpec index_map selects the rows,
        # so there is no wrapper-side slice copy of the table in HBM.
        row_tile = _pick_row_tile(S, D, itemsize)
        b_tile = _pick_batch_tile(B, S, D, itemsize, row_tile)
        return _abs_pos_emb_call(
            x, embedding, b_tile=b_tile, row_tile=row_tile,
            dropout_p=dropout_p, training=training, seed=seed,
        )

    # Small / awkward D: flatten the (S, D) plane so the last dim presented to the
    # kernel is a full 128-lane multiple whenever possible (unmasked stores).
    emb = embedding if L == S else embedding[:, :S, :]
    if (S * D) % 128 == 0:
        C = 128
        R = (S * D) // 128
    else:
        C = S * D
        R = 1
    x3 = x.reshape(B, R, C)
    emb3 = emb.reshape(1, R, C)
    row_tile = _pick_row_tile(R, C, itemsize)
    b_tile = _pick_batch_tile(B, R, C, itemsize, row_tile)
    out = _abs_pos_emb_call(
        x3, emb3, b_tile=b_tile, row_tile=row_tile,
        dropout_p=dropout_p, training=training, seed=seed,
    )
    return out.reshape(B, S, D)


def init_abs_pos_embedding(key, d_embed, max_seq_len=512, std=0.02, dtype=jnp.float32):
    """trunc_normal_(embedding, std=0.02): truncated normal in [-2*std, 2*std]."""
    return std * jax.random.truncated_normal(
        key, -2.0, 2.0, (1, max_seq_len, d_embed), dtype=dtype
    )


if __name__ == "__main__":
    key = jax.random.PRNGKey(0)
    k_x, k_emb = jax.random.split(key)

    B, S, D = 2, 8, 32
    max_seq_len = S  # module default expects n_token == max_seq_len

    x = jax.random.normal(k_x, (B, S, D), dtype=jnp.float32)
    embedding = init_abs_pos_embedding(k_emb, d_embed=D, max_seq_len=max_seq_len)

    # Eval-mode forward (dropout is identity) -- deterministic, verifiable.
    out_eval = absolute_position_embedding(x, embedding, dropout_p=0.1, training=False)
    out_eval = jax.block_until_ready(out_eval)

    ref = x + embedding[:, :S, :]
    assert out_eval.shape == (B, S, D)
    assert jnp.allclose(out_eval, ref, atol=1e-6), "eval-mode mismatch vs reference"

    # Training-mode forward (in-kernel counter-hash dropout, inverted scaling).
    out_train = absolute_position_embedding(
        x, embedding, dropout_p=0.1, training=True, seed=1234
    )
    out_train = jax.block_until_ready(out_train)
    assert out_train.shape == (B, S, D)

    # kept entries equal ref / (1 - p); dropped entries are exactly zero
    kept = out_train != 0.0
    assert jnp.allclose(
        jnp.where(kept, out_train, 0.0), jnp.where(kept, ref / 0.9, 0.0), atol=1e-5
    ), "training-mode dropout scaling mismatch"
    drop_frac = float(jnp.mean((out_train == 0.0).astype(jnp.float32)))
    assert 0.0 < drop_frac < 0.5, f"dropout rate looks wrong: {drop_frac}"

    print("KERNEL_OK")
</pallas_src>

<mosaic_0001>
module attributes {stable_mosaic.version = 11 : i64} {
  func.func @_abs_pos_emb_kernel(%arg0: i32, %arg1: i32, %arg2: memref<1xi32, #tpu.memory_space<smem>>, %arg3: memref<2x2x128xf32, #tpu.memory_space<vmem>>, %arg4: memref<1x2x128xf32, #tpu.memory_space<vmem>>, %arg5: memref<2x2x128xf32, #tpu.memory_space<vmem>>) attributes {dimension_semantics = [#tpu.dimension_semantics<parallel>, #tpu.dimension_semantics<parallel>], iteration_bounds = array<i64: 1, 1>, scalar_prefetch = 1 : i64, scratch_operands = 0 : i64, tpu.core_type = #tpu.core_type<tc>, window_params = [{transform_indices = @transform_0, window_bounds = array<i64: 2, 2, 128>}, {transform_indices = @transform_1, window_bounds = array<i64: 1, 2, 128>}, {transform_indices = @transform_2, window_bounds = array<i64: 2, 2, 128>}]} {
    %c0 = arith.constant 0 : index
    %c0_0 = arith.constant 0 : index
    %c0_1 = arith.constant 0 : index
    %0 = vector.load %arg3[%c0, %c0_0, %c0_1] : memref<2x2x128xf32, #tpu.memory_space<vmem>>, vector<2x2x128xf32>
    %c0_2 = arith.constant 0 : index
    %c0_3 = arith.constant 0 : index
    %c0_4 = arith.constant 0 : index
    %1 = vector.load %arg4[%c0_2, %c0_3, %c0_4] : memref<1x2x128xf32, #tpu.memory_space<vmem>>, vector<1x2x128xf32>
    %2 = vector.broadcast %1 : vector<1x2x128xf32> to vector<2x2x128xf32>
    %3 = arith.addf %0, %2 : vector<2x2x128xf32>
    %c0_5 = arith.constant 0 : index
    %c0_6 = arith.constant 0 : index
    %c0_7 = arith.constant 0 : index
    %4 = vector.load %arg5[%c0_5, %c0_6, %c0_7] : memref<2x2x128xf32, #tpu.memory_space<vmem>>, vector<2x2x128xf32>
    tpu.vector_store %arg5[%c0_5, %c0_6, %c0_7], %3 {strides = array<i32>} : memref<2x2x128xf32, #tpu.memory_space<vmem>>, vector<2x2x128xf32>,
    return
  }
  func.func @transform_0(%arg0: i32, %arg1: i32, %arg2: memref<1xi32, #tpu.memory_space<smem>>) -> (i32, i32, i32) {
    %c0_i32 = arith.constant 0 : i32
    %c0_i32_0 = arith.constant 0 : i32
    return %arg1, %arg0, %c0_i32 : i32, i32, i32
  }
  func.func @transform_1(%arg0: i32, %arg1: i32, %arg2: memref<1xi32, #tpu.memory_space<smem>>) -> (i32, i32, i32) {
    %c0_i32 = arith.constant 0 : i32
    %c0_i32_0 = arith.constant 0 : i32
    %c0_i32_1 = arith.constant 0 : i32
    return %c0_i32, %arg0, %c0_i32_0 : i32, i32, i32
  }
  func.func @transform_2(%arg0: i32, %arg1: i32, %arg2: memref<1xi32, #tpu.memory_space<smem>>) -> (i32, i32, i32) {
    %c0_i32 = arith.constant 0 : i32
    %c0_i32_0 = arith.constant 0 : i32
    return %arg1, %arg0, %c0_i32 : i32, i32, i32
  }
}

</mosaic_0001>

<llo_original>
// kernel: tpu_custom_call.1
$region0: #{tpu_custom_call.1}
  #allocation0 [shape = 'u32[]', space=smem, size = 0x4, offset = 0x4, fixed_abs, tag = 'smem constant byte address 0x4 - core index']
  #allocation1 [shape = 'u32[144,128]{1,0:T(1,128)}', space=vmem, size = 0x12000, scoped, tag = 'internal scratch']
  #allocation2 [shape = 's32[1]{0}', space=sflag, size = 0x4, scoped, tag = 'scoped memory for tpu_custom_call.1']
  #allocation3 [shape = 's32[1]{0:T(128)S(6)}', space=smem, size = 0x200, scoped, tag = 'prefetched SMEM operand 0']
  %s0 = inlined_call_operand.<no memory space> [shape: s32[1], index: 0, kind: input, shape index: {}]
  %s1 = inlined_call_operand.hbm [shape: f32[2,2,128], index: 1, kind: input, shape index: {}]
  %s2 = inlined_call_operand.vmem [shape: f32[1,2,128], index: 2, kind: input, shape index: {}]
  %s3 = inlined_call_operand.hbm [shape: f32[2,2,128], index: 3, kind: output, shape index: {}]
  %s4 = sld [smem:[#allocation0]]
  $region22: #{tpu_custom_call.1} parent=0
    _
  %s6 = ssub.s32 1, %s4
  %s7 = scalar_select 0, %s6, %s4
  %8 = sst [smem:[#allocation3]] %s0
  $region1: #{tpu_custom_call.1} parent=0
    #allocation4 [shape = 'u8[2048]{0}', space=vmem, size = 0x800, scoped, tag = 'input window, operand 1, single buffered']
    #allocation5 [shape = 's32[1]{0}', space=sflag, size = 0x4, scoped, tag = 'scoped memory for tpu_custom_call.1']
    #allocation6 [shape = 's32[1]{0}', space=sflag, size = 0x4, scoped, tag = 'scoped memory for tpu_custom_call.1']
    #allocation7 [shape = 'u8[2048]{0}', space=vmem, size = 0x800, scoped, tag = 'output window, operand 0, single buffered']
    %9 = vsyncpa [#allocation5], 0
    %10 = vsyncpa [#allocation6], 0
    // Predicated region
    $region2: #{tpu_custom_call.1} parent=1 // pred_check
      _
    $region3: #{tpu_custom_call.1} parent=1 // pred_check_branch
      %12 = sbr.rel (0) target = $region5
    $region4: #{tpu_custom_call.1} parent=1 // pred_region
      %s14 = ssub.s32 64, 64
      %15 = vsyncadd [#allocation5], %s14
      %s16 = sshll.u32 [#allocation4], 4
      %s17 = int_to_ptr.vmem [resolvable:$true] %s16
      %22 = dma.hbm_to_vmem [thread:$0]  %s1, 64, %s17, [#allocation5], 32, 32, 2
    $region5: #{tpu_custom_call.1} parent=1 // pred_fallthru
      _
    // Predicated region
    $region6: #{tpu_custom_call.1} parent=1 // pred_check
      _
    $region7: #{tpu_custom_call.1} parent=1 // pred_check_branch
      %24 = sbr.rel (0) target = $region9
    $region8: #{tpu_custom_call.1} parent=1 // pred_region
      _
    $region9: #{tpu_custom_call.1} parent=1 // pred_fallthru
      _
    // Predicated region
    $region10: #{tpu_custom_call.1} parent=1 // pred_check
      _
    $region11: #{tpu_custom_call.1} parent=1 // pred_check_branch
      %26 = sbr.rel (0) target = $region13
    $region12: #{tpu_custom_call.1} parent=1 // pred_region
      %27 = dma.done [#allocation5], 64
    $region13: #{tpu_custom_call.1} parent=1 // pred_fallthru
      _
    %v28 = vld [vmem:[#allocation4] sm:$0x3]
    %v29 = vld [vmem:[#allocation4 + $0x2] sm:$0x3]
    %v30 = vld [vmem:[%s2] sm:$0x3]
    %v31 = vadd.f32 %v28, %v30
    %v32 = vadd.f32 %v29, %v30
    %33 = vst [vmem:[#allocation7] sm:$0x3] %v31
    %34 = vst [vmem:[#allocation7 + $0x2] sm:$0x3] %v32
    // Predicated region
    $region14: #{tpu_custom_call.1} parent=1 // pred_check
      _
    $region15: #{tpu_custom_call.1} parent=1 // pred_check_branch
      %36 = sbr.rel (0) target = $region17
    $region16: #{tpu_custom_call.1} parent=1 // pred_region
      %s38 = ssub.s32 64, 64
      %39 = vsyncadd [#allocation6], %s38
      %s40 = sshll.u32 [#allocation7], 4
      %s41 = int_to_ptr.vmem [resolvable:$true] %s40
      %46 = dma.vmem_to_hbm [thread:$0]  %s41, 64, %s3, [#allocation6], 32, 32, 2
    $region17: #{tpu_custom_call.1} parent=1 // pred_fallthru
      _
    // Predicated region
    $region18: #{tpu_custom_call.1} parent=1 // pred_check
      _
    $region19: #{tpu_custom_call.1} parent=1 // pred_check_branch
      %48 = sbr.rel (0) target = $region21
    $region20: #{tpu_custom_call.1} parent=1 // pred_region
      %49 = dma.done [#allocation6], 64
    $region21: #{tpu_custom_call.1} parent=1 // pred_fallthru
      _
    %50 = vsyncpa [#allocation5], 1
    %51 = vsyncpa [#allocation6], 1

</llo_original>
